<compile_context>
chip_gen: v7x
topology: tpu7x:2x2x1
jax: 0.10.0
libtpu: 0.0.40
codegen_flags: <defaults>
</compile_context>

<pallas_src>
import functools

import jax
import jax.numpy as jnp
from jax.experimental import pallas as pl
from jax.experimental.pallas import tpu as pltpu


# ---------------------------------------------------------------------------
# Model / postprocessor configuration (small, synthetic)
# ---------------------------------------------------------------------------
IMG_C = 3          # input image channels (RGB)
IMG_HW = 32        # input spatial size
PATCH = 8          # patchify stride -> Q = (32/8)^2 = 16 "queries"
NUM_QUERIES = (IMG_HW // PATCH) ** 2          # 16
PATCH_DIM = PATCH * PATCH * IMG_C             # 192
HIDDEN = 32
NUM_CLASSES = 8
HEAD_OUT = NUM_CLASSES + 4                    # fused class+box head width (12)
NUM_TOP_QUERIES = 10                          # RT-DETR uses 300; scaled down


# ---------------------------------------------------------------------------
# Pallas kernel: whole-batch detection head + deploy-mode postprocess math
# ---------------------------------------------------------------------------
def _detr_head_kernel(x_ref, ws_ref, wh_ref, bias_ref, scale_ref, out_ref):
    # x_ref:     (B*Q, P)        bf16 patch tokens, whole batch at once
    # ws_ref:    (P, H)          bf16 stem (patch embedding) weights
    # wh_ref:    (H, C+4)        bf16 fused class+box head weights
    # bias_ref:  (1, H + C + 4)  f32 packed biases [b_stem | b_cls | b_box]
    # scale_ref: (B*Q, 4)        f32 per-row [w, h, w, h] original image size
    # out_ref:   (B*Q, C+4)      f32 [sigmoid scores | scaled xyxy boxes]
    b_stem = bias_ref[:, :HIDDEN]                       # (1, H)
    b_head = bias_ref[:, HIDDEN:]                       # (1, C+4)

    # --- "model": patch embedding + fused heads (bf16 MXU, f32 accumulate) ---
    h = jnp.dot(x_ref[...], ws_ref[...],
                preferred_element_type=jnp.float32) + b_stem
    h = jnp.maximum(h, 0.0)                             # ReLU, f32 [B*Q, H]

    head = jnp.dot(h.astype(jnp.bfloat16), wh_ref[...],
                   preferred_element_type=jnp.float32) + b_head   # [B*Q, C+4]

    # --- postprocessor.deploy(): sigmoid everywhere (focal-loss scores, box logits) ---
    act = jax.nn.sigmoid(head)                          # [B*Q, C+4]
    scores = act[:, :NUM_CLASSES]                       # [B*Q, C]
    box = act[:, NUM_CLASSES:]                          # [B*Q, 4] cxcywh in [0,1]

    # --- box_cxcywh_to_xyxy on the VPU, then scale by original image size ---
    cxcy = box[:, :2]
    wh = box[:, 2:]
    xyxy = jnp.concatenate([cxcy - 0.5 * wh, cxcy + 0.5 * wh], axis=-1)
    xyxy = xyxy * scale_ref[...]                        # [B*Q, 4]

    out_ref[...] = jnp.concatenate([scores, xyxy], axis=-1)


def _run_head(patches_bq, w_stem, w_head, biases, scale_rows):
    BQ, _ = patches_bq.shape
    vmem = pl.BlockSpec(memory_space=pltpu.MemorySpace.VMEM)
    return pl.pallas_call(
        _detr_head_kernel,
        out_shape=jax.ShapeDtypeStruct((BQ, HEAD_OUT), jnp.float32),
        in_specs=[vmem, vmem, vmem, vmem, vmem],
        out_specs=vmem,
    )(patches_bq, w_stem, w_head, biases, scale_rows)


# ---------------------------------------------------------------------------
# ModelWrapper.forward equivalent
# ---------------------------------------------------------------------------
def _patchify(images_nchw):
    """NCHW float images -> [B, Q, P] patch tokens (glue; layout plumbing only)."""
    B, C, Hh, Ww = images_nchw.shape
    x = jnp.transpose(images_nchw, (0, 2, 3, 1))                    # NHWC
    x = x.reshape(B, Hh // PATCH, PATCH, Ww // PATCH, PATCH, C)
    x = jnp.transpose(x, (0, 1, 3, 2, 4, 5))                        # B, gh, gw, p, p, C
    return x.reshape(B, NUM_QUERIES, PATCH_DIM)


@jax.jit
def model_wrapper_forward(images, orig_target_sizes, params):
    """images: [B, 3, 32, 32] float32 (NCHW), orig_target_sizes: [B, 2] = (w, h)."""
    B = images.shape[0]

    # Fold the batch: one [B*Q, P] token matrix, one kernel invocation.
    patches = _patchify(images).reshape(B * NUM_QUERIES, PATCH_DIM)
    patches = patches.astype(jnp.bfloat16)

    # Per-row scale [w, h, w, h] (each image's scale repeated over its Q queries).
    sizes = orig_target_sizes.astype(jnp.float32)
    scale4 = jnp.concatenate([sizes, sizes], axis=-1)               # [B, 4]
    scale_rows = jnp.repeat(scale4, NUM_QUERIES, axis=0)            # [B*Q, 4]

    # Fuse class + box heads into one weight; pack all biases into one row.
    w_stem = params["w_stem"].astype(jnp.bfloat16)                  # [P, H]
    w_head = jnp.concatenate([params["w_cls"], params["w_box"]],
                             axis=1).astype(jnp.bfloat16)           # [H, C+4]
    biases = jnp.concatenate([params["b_stem"], params["b_cls"],
                              params["b_box"]], axis=1)             # [1, H+C+4] f32

    out = _run_head(patches, w_stem, w_head, biases, scale_rows)    # [B*Q, C+4]

    scores = out[:, :NUM_CLASSES].reshape(B, NUM_QUERIES, NUM_CLASSES)
    boxes_xyxy = out[:, NUM_CLASSES:].reshape(B, NUM_QUERIES, 4)

    # ----- top-k over flattened (queries * classes), as in RTDETRPostProcessor -----
    # TODO(synk): top-k selection + label/box gather kept in plain JAX (no dense hot path).
    flat = scores.reshape(B, NUM_QUERIES * NUM_CLASSES)
    top_scores, index = jax.lax.top_k(flat, NUM_TOP_QUERIES)        # [B, K]
    labels = index % NUM_CLASSES                                    # [B, K]
    q_index = index // NUM_CLASSES                                  # [B, K]
    top_boxes = jnp.take_along_axis(boxes_xyxy, q_index[..., None], axis=1)  # [B, K, 4]
    return labels, top_boxes, top_scores


# ---------------------------------------------------------------------------
# Deterministic parameter init
# ---------------------------------------------------------------------------
def init_params(key):
    ks = jax.random.split(key, 6)
    sc = 0.05
    return {
        "w_stem": sc * jax.random.normal(ks[0], (PATCH_DIM, HIDDEN), jnp.float32),
        "b_stem": sc * jax.random.normal(ks[1], (1, HIDDEN), jnp.float32),
        "w_cls":  sc * jax.random.normal(ks[2], (HIDDEN, NUM_CLASSES), jnp.float32),
        "b_cls":  sc * jax.random.normal(ks[3], (1, NUM_CLASSES), jnp.float32),
        "w_box":  sc * jax.random.normal(ks[4], (HIDDEN, 4), jnp.float32),
        "b_box":  sc * jax.random.normal(ks[5], (1, 4), jnp.float32),
    }


if __name__ == "__main__":
    key = jax.random.PRNGKey(0)
    k_img, k_par = jax.random.split(key)

    B = 2
    images = jax.random.uniform(k_img, (B, IMG_C, IMG_HW, IMG_HW), jnp.float32)
    orig_target_sizes = jnp.array([[640, 640], [512, 480]], dtype=jnp.int32)

    params = init_params(k_par)

    labels, boxes, scores = model_wrapper_forward(images, orig_target_sizes, params)
    jax.block_until_ready((labels, boxes, scores))

    assert labels.shape == (B, NUM_TOP_QUERIES)
    assert boxes.shape == (B, NUM_TOP_QUERIES, 4)
    assert scores.shape == (B, NUM_TOP_QUERIES)
    assert bool(jnp.all(jnp.isfinite(boxes))) and bool(jnp.all(jnp.isfinite(scores)))

    print("KERNEL_OK")
</pallas_src>

<mosaic_0001>
module attributes {stable_mosaic.version = 11 : i64} {
  func.func @_detr_head_kernel(%arg0: memref<32x192xbf16, #tpu.memory_space<vmem>>, %arg1: memref<192x32xbf16, #tpu.memory_space<vmem>>, %arg2: memref<32x12xbf16, #tpu.memory_space<vmem>>, %arg3: memref<1x44xf32, #tpu.memory_space<vmem>>, %arg4: memref<32x4xf32, #tpu.memory_space<vmem>>, %arg5: memref<32x12xf32, #tpu.memory_space<vmem>>) attributes {dimension_semantics = [], scalar_prefetch = 0 : i64, scratch_operands = 0 : i64, tpu.core_type = #tpu.core_type<tc>} {
    %c0 = arith.constant 0 : index
    %c0_0 = arith.constant 0 : index
    %0 = vector.load %arg3[%c0, %c0_0] : memref<1x44xf32, #tpu.memory_space<vmem>>, vector<1x32xf32>
    %c0_1 = arith.constant 0 : index
    %c32 = arith.constant 32 : index
    %1 = vector.load %arg3[%c0_1, %c32] : memref<1x44xf32, #tpu.memory_space<vmem>>, vector<1x12xf32>
    %c0_2 = arith.constant 0 : index
    %c0_3 = arith.constant 0 : index
    %2 = vector.load %arg0[%c0_2, %c0_3] : memref<32x192xbf16, #tpu.memory_space<vmem>>, vector<32x192xbf16>
    %c0_4 = arith.constant 0 : index
    %c0_5 = arith.constant 0 : index
    %3 = vector.load %arg1[%c0_4, %c0_5] : memref<192x32xbf16, #tpu.memory_space<vmem>>, vector<192x32xbf16>
    %cst = arith.constant dense<0.000000e+00> : vector<32x32xf32>
    %4 = tpu.matmul %2, %3, %cst {dimension_numbers = #tpu.dot_dimension_numbers<[1], [0], [0], [1], [0, 0, 1, 1], [], []>} : vector<32x192xbf16>, vector<192x32xbf16>, vector<32x32xf32> -> vector<32x32xf32>
    %5 = vector.broadcast %0 : vector<1x32xf32> to vector<32x32xf32>
    %6 = arith.addf %4, %5 : vector<32x32xf32>
    %cst_6 = arith.constant 0.000000e+00 : f32
    %7 = vector.broadcast %cst_6 : f32 to vector<32x32xf32>
    %8 = arith.maximumf %6, %7 : vector<32x32xf32>
    %9 = arith.truncf %8 : vector<32x32xf32> to vector<32x32xbf16>
    %c0_7 = arith.constant 0 : index
    %c0_8 = arith.constant 0 : index
    %10 = vector.load %arg2[%c0_7, %c0_8] : memref<32x12xbf16, #tpu.memory_space<vmem>>, vector<32x12xbf16>
    %cst_9 = arith.constant dense<0.000000e+00> : vector<32x12xf32>
    %11 = tpu.matmul %9, %10, %cst_9 {dimension_numbers = #tpu.dot_dimension_numbers<[1], [0], [0], [1], [0, 0, 1, 1], [], []>} : vector<32x32xbf16>, vector<32x12xbf16>, vector<32x12xf32> -> vector<32x12xf32>
    %12 = vector.broadcast %1 : vector<1x12xf32> to vector<32x12xf32>
    %13 = arith.addf %11, %12 : vector<32x12xf32>
    %14 = arith.negf %13 : vector<32x12xf32>
    %15 = math.exp %14 : vector<32x12xf32>
    %cst_10 = arith.constant 1.000000e+00 : f32
    %16 = vector.broadcast %cst_10 : f32 to vector<32x12xf32>
    %17 = arith.addf %16, %15 : vector<32x12xf32>
    %18 = arith.divf %16, %17 : vector<32x12xf32>
    %19 = vector.extract_strided_slice %18 {offsets = [0, 0], sizes = [32, 8], strides = [1, 1]} : vector<32x12xf32> to vector<32x8xf32>
    %20 = vector.extract_strided_slice %18 {offsets = [0, 8], sizes = [32, 4], strides = [1, 1]} : vector<32x12xf32> to vector<32x4xf32>
    %21 = vector.extract_strided_slice %20 {offsets = [0, 0], sizes = [32, 2], strides = [1, 1]} : vector<32x4xf32> to vector<32x2xf32>
    %22 = vector.extract_strided_slice %20 {offsets = [0, 2], sizes = [32, 2], strides = [1, 1]} : vector<32x4xf32> to vector<32x2xf32>
    %cst_11 = arith.constant 5.000000e-01 : f32
    %23 = vector.broadcast %cst_11 : f32 to vector<32x2xf32>
    %24 = arith.mulf %23, %22 : vector<32x2xf32>
    %25 = arith.subf %21, %24 : vector<32x2xf32>
    %cst_12 = arith.constant 5.000000e-01 : f32
    %26 = vector.broadcast %cst_12 : f32 to vector<32x2xf32>
    %27 = arith.mulf %26, %22 : vector<32x2xf32>
    %28 = arith.addf %21, %27 : vector<32x2xf32>
    %29 = tpu.concatenate %25, %28 in 1 : vector<32x2xf32>, vector<32x2xf32> -> vector<32x4xf32>
    %c0_13 = arith.constant 0 : index
    %c0_14 = arith.constant 0 : index
    %30 = vector.load %arg4[%c0_13, %c0_14] : memref<32x4xf32, #tpu.memory_space<vmem>>, vector<32x4xf32>
    %31 = arith.mulf %29, %30 : vector<32x4xf32>
    %32 = tpu.concatenate %19, %31 in 1 : vector<32x8xf32>, vector<32x4xf32> -> vector<32x12xf32>
    %c0_15 = arith.constant 0 : index
    %c0_16 = arith.constant 0 : index
    %33 = vector.load %arg5[%c0_15, %c0_16] : memref<32x12xf32, #tpu.memory_space<vmem>>, vector<32x12xf32>
    tpu.vector_store %arg5[%c0_15, %c0_16], %32 {strides = array<i32>} : memref<32x12xf32, #tpu.memory_space<vmem>>, vector<32x12xf32>,
    return
  }
}

</mosaic_0001>

<llo_original>
// kernel: model_wrapper_forward.1
$region0: #{model_wrapper_forward.1}
  #allocation0 [shape = 'u32[]', space=smem, size = 0x4, offset = 0x4, fixed_abs, tag = 'smem constant byte address 0x4 - core index']
  #allocation1 [shape = 'u32[144,128]{1,0:T(1,128)}', space=vmem, size = 0x12000, scoped, tag = 'internal scratch']
  %s0 = inlined_call_operand.vmem [shape: bf16[32,192], index: 0, kind: input, shape index: {}]
  %s1 = inlined_call_operand.vmem [shape: bf16[192,32], index: 1, kind: input, shape index: {}]
  %s2 = inlined_call_operand.vmem [shape: bf16[32,12], index: 2, kind: input, shape index: {}]
  %s3 = inlined_call_operand.vmem [shape: f32[1,44], index: 3, kind: input, shape index: {}]
  %s4 = inlined_call_operand.vmem [shape: f32[32,4], index: 4, kind: input, shape index: {}]
  %s5 = inlined_call_operand.vmem [shape: f32[32,12], index: 5, kind: output, shape index: {}]
  %s6 = sld [smem:[#allocation0]]
  $region30: #{model_wrapper_forward.1} parent=0
    _
  %s8 = ssub.s32 1, %s6
  %s9 = scalar_select 0, %s8, %s6
  // Predicated region
  $region2: #{model_wrapper_forward.1} parent=0 // pred_check
    _
  $region3: #{model_wrapper_forward.1} parent=0 // pred_check_branch
    %11 = sbr.rel (0) target = $region5
  $region4: #{model_wrapper_forward.1} parent=0 // pred_region
    _
  $region5: #{model_wrapper_forward.1} parent=0 // pred_fallthru
    _
  // Predicated region
  $region6: #{model_wrapper_forward.1} parent=0 // pred_check
    _
  $region7: #{model_wrapper_forward.1} parent=0 // pred_check_branch
    %13 = sbr.rel (0) target = $region9
  $region8: #{model_wrapper_forward.1} parent=0 // pred_region
    _
  $region9: #{model_wrapper_forward.1} parent=0 // pred_fallthru
    _
  // Predicated region
  $region10: #{model_wrapper_forward.1} parent=0 // pred_check
    _
  $region11: #{model_wrapper_forward.1} parent=0 // pred_check_branch
    %15 = sbr.rel (0) target = $region13
  $region12: #{model_wrapper_forward.1} parent=0 // pred_region
    _
  $region13: #{model_wrapper_forward.1} parent=0 // pred_fallthru
    _
  // Predicated region
  $region14: #{model_wrapper_forward.1} parent=0 // pred_check
    _
  $region15: #{model_wrapper_forward.1} parent=0 // pred_check_branch
    %17 = sbr.rel (0) target = $region17
  $region16: #{model_wrapper_forward.1} parent=0 // pred_region
    _
  $region17: #{model_wrapper_forward.1} parent=0 // pred_fallthru
    _
  // Predicated region
  $region18: #{model_wrapper_forward.1} parent=0 // pred_check
    _
  $region19: #{model_wrapper_forward.1} parent=0 // pred_check_branch
    %19 = sbr.rel (0) target = $region21
  $region20: #{model_wrapper_forward.1} parent=0 // pred_region
    _
  $region21: #{model_wrapper_forward.1} parent=0 // pred_fallthru
    _
  %v21 = vld [vmem:[%s3] sm:$0x1]
  %v22 = vld [vmem:[%s0] sm:$0xff]
  %v23 = vld [vmem:[%s0 + $0x8] sm:$0xff]
  %v24 = vld [vmem:[%s0 + $0x10] sm:$0xff]
  %v25 = vld [vmem:[%s0 + $0x18] sm:$0xff]
  %v26 = vld [vmem:[%s1] sm:$0xf]
  %v27 = vld [vmem:[%s1 + $0x4] sm:$0xf]
  %v28 = vld [vmem:[%s1 + $0x8] sm:$0xf]
  %v29 = vld [vmem:[%s1 + $0xc] sm:$0xf]
  %v30 = vld [vmem:[%s1 + $0x10] sm:$0xf]
  %v31 = vld [vmem:[%s1 + $0x14] sm:$0xf]
  %v32 = vld [vmem:[%s1 + $0x18] sm:$0xf]
  %v33 = vld [vmem:[%s1 + $0x1c] sm:$0xf]
  %v34 = vld [vmem:[%s1 + $0x20] sm:$0xf]
  %v35 = vld [vmem:[%s1 + $0x24] sm:$0xf]
  %v36 = vld [vmem:[%s1 + $0x28] sm:$0xf]
  %v37 = vld [vmem:[%s1 + $0x2c] sm:$0xf]
  %v38 = vld [vmem:[%s1 + $0x30] sm:$0xf]
  %v39 = vld [vmem:[%s1 + $0x34] sm:$0xf]
  %v40 = vld [vmem:[%s1 + $0x38] sm:$0xf]
  %v41 = vld [vmem:[%s1 + $0x3c] sm:$0xf]
  %v42 = vld [vmem:[%s1 + $0x40] sm:$0xf]
  %v43 = vld [vmem:[%s1 + $0x44] sm:$0xf]
  %v44 = vld [vmem:[%s1 + $0x48] sm:$0xf]
  %v45 = vld [vmem:[%s1 + $0x4c] sm:$0xf]
  %v46 = vld [vmem:[%s1 + $0x50] sm:$0xf]
  %v47 = vld [vmem:[%s1 + $0x54] sm:$0xf]
  %v48 = vld [vmem:[%s1 + $0x58] sm:$0xf]
  %v49 = vld [vmem:[%s1 + $0x5c] sm:$0xf]
  %v51 = vlaneseq
  %v52 = vshrl.u32 %v51, 7
  %v53 = vsub.s32 0, %v52
  %v54 = vrot.slane %v21, %v53
  %v60 = vunpack.c.l.b16 %v22
  %v61 = vunpack.c.h.b16 %v22
  %v62 = vunpack.c.l.b16 %v23
  %v63 = vunpack.c.h.b16 %v23
  %v64 = vunpack.c.l.b16 %v24
  %v65 = vunpack.c.h.b16 %v24
  %v66 = vunpack.c.l.b16 %v25
  %v67 = vunpack.c.h.b16 %v25
  %v68 = vpack.c.b16 %v62, %v60
  %v69 = vpack.c.b16 %v63, %v61
  %v70 = vpack.c.b16 %v66, %v64
  %v71 = vpack.c.b16 %v67, %v65
  %v98 = vunpack.c.l.b16 %v26
  %v99 = vunpack.c.l.b16 %v27
  %v100 = vunpack.c.l.b16 %v28
  %v101 = vunpack.c.l.b16 %v29
  %v102 = vunpack.c.l.b16 %v30
  %v103 = vunpack.c.l.b16 %v31
  %v104 = vunpack.c.l.b16 %v32
  %v105 = vunpack.c.l.b16 %v33
  %v106 = vunpack.c.l.b16 %v34
  %v107 = vunpack.c.l.b16 %v35
  %v108 = vunpack.c.l.b16 %v36
  %v109 = vunpack.c.l.b16 %v37
  %v110 = vunpack.c.l.b16 %v38
  %v111 = vunpack.c.l.b16 %v39
  %v112 = vunpack.c.l.b16 %v40
  %v113 = vunpack.c.l.b16 %v41
  %v114 = vunpack.c.l.b16 %v42
  %v115 = vunpack.c.l.b16 %v43
  %v116 = vunpack.c.l.b16 %v44
  %v117 = vunpack.c.l.b16 %v45
  %v118 = vunpack.c.l.b16 %v46
  %v119 = vunpack.c.l.b16 %v47
  %v120 = vunpack.c.l.b16 %v48
  %v121 = vunpack.c.l.b16 %v49
  %v122 = vpack.c.b16 %v99, %v98
  %v123 = vpack.c.b16 %v101, %v100
  %v124 = vpack.c.b16 %v103, %v102
  %v125 = vpack.c.b16 %v105, %v104
  %v126 = vpack.c.b16 %v107, %v106
  %v127 = vpack.c.b16 %v109, %v108
  %v128 = vpack.c.b16 %v111, %v110
  %v129 = vpack.c.b16 %v113, %v112
  %v130 = vpack.c.b16 %v115, %v114
  %v131 = vpack.c.b16 %v117, %v116
  %v132 = vpack.c.b16 %v119, %v118
  %v133 = vpack.c.b16 %v121, %v120
  %vm146 = vcmask 523264
  %v148 = vsel %vm146, %v69, 0
  %v151 = vsel %vm146, %v71, 0
  %153 = vmatprep.subr.bf16.mxu0 0
  %154 = vmatpush1.bf16.msra.mxu0 %v122
  %155 = vmatprep.subr.bf16.mxu0 0
  %156 = vmatpush1.bf16.msra.mxu0 %v123
  %157 = vmatprep.subr.bf16.mxu0 0
  %158 = vmatpush1.bf16.msra.mxu0 %v124
  %159 = vmatprep.subr.bf16.mxu0 0
  %160 = vmatpush1.bf16.msra.mxu0 %v125
  %161 = vmatprep.subr.bf16.mxu0 0
  %162 = vmatpush1.bf16.msra.mxu0 %v126
  %163 = vmatprep.subr.bf16.mxu0 0
  %164 = vmatpush1.bf16.msra.mxu0 %v127
  %165 = vmatprep.subr.bf16.mxu0 0
  %166 = vmatpush1.bf16.msra.mxu0 %v128
  %167 = vmatprep.subr.bf16.mxu0 0
  %168 = vmatpush1.bf16.msra.mxu0 %v129
  %169 = vmatprep.subr.bf16.mxu0 0
  %170 = vmatpush1.bf16.msra.mxu0 %v130
  %171 = vmatprep.subr.bf16.mxu0 0
  %172 = vmatpush1.bf16.msra.mxu0 %v131
  %173 = vmatprep.subr.bf16.mxu0 0
  %174 = vmatpush1.bf16.msra.mxu0 %v132
  %175 = vmatprep.subr.bf16.mxu0 0
  %176 = vmatpush1.bf16.msra.mxu0 %v133
  %177 = vmatprep.subr.bf16.mxu0 0
  %178 = vmatpush1.bf16.msra.mxu0 0
  %179 = vmatprep.subr.bf16.mxu0 0
  %180 = vmatpush1.bf16.msra.mxu0 0
  %181 = vmatprep.subr.bf16.mxu0 0
  %182 = vmatpush1.bf16.msra.mxu0 0
  %183 = vmatprep.subr.bf16.mxu0 0
  %184 = vmatpush1.bf16.msra.mxu0 0
  %185 = vmatprep.mubr.bf16.mxu0 %v148
  %186 = vmatmul.mubr.bf16.gmra.mrb[0].mxu0 %v68
  %v187 = vpop.f32.mrb[0].mxu0
  %v188 = vadd.f32 %v54, %v187
  %v189 = vpop.f32.mrb[0].mxu0
  %v190 = vpop.f32.mrb[0].mxu0
  %v191 = vadd.f32 %v54, %v190
  %v192 = vpop.f32.mrb[0].mxu0
  %193 = vmatprep.mubr.bf16.mxu0 %v151
  %194 = vmatmul.mubr.bf16.gmra.mrb[0].mxu0 %v70
  %v195 = vpop.f32.mrb[0].mxu0
  %v196 = vadd.f32 %v54, %v195
  %v197 = vpop.f32.mrb[0].mxu0
  %v198 = vpop.f32.mrb[0].mxu0
  %v199 = vadd.f32 %v54, %v198
  %v200 = vpop.f32.mrb[0].mxu0
  %201 = vdwg.mxu0
  %v202 = vmax.f32 %v188, 0.0
  %v203 = vmax.f32 %v191, 0.0
  %v204 = vmax.f32 %v196, 0.0
  %v205 = vmax.f32 %v199, 0.0
  %v206 = vpack.c.bf16 %v203, %v202
  %v207 = vpack.c.bf16 %v205, %v204
  %v208 = vld [vmem:[%s2] sm:$0xf]
  %v209 = vld [vmem:[%s2 + $0x4] sm:$0xf]
  %v210 = vld [vmem:[%s2 + $0x8] sm:$0xf]
  %v211 = vld [vmem:[%s2 + $0xc] sm:$0xf]
  %v216 = vunpack.c.l.b16 %v208
  %v217 = vunpack.c.l.b16 %v209
  %v218 = vunpack.c.l.b16 %v210
  %v219 = vunpack.c.l.b16 %v211
  %v220 = vpack.c.b16 %v217, %v216
  %v221 = vpack.c.b16 %v219, %v218
  %224 = vrot.lane.b32.xlu0 %v54, 96
  %v225 = vpop.permute.xlu0 %224
  %vm227 = vcmask 261120
  %v229 = vsel %vm227, %v206, 0
  %v232 = vsel %vm227, %v207, 0
  %234 = vmatprep.subr.bf16.mxu0 0
  %235 = vmatpush1.bf16.msra.mxu0 %v220
  %236 = vmatprep.subr.bf16.mxu0 0
  %237 = vmatpush1.bf16.msra.mxu0 %v221
  %238 = vmatprep.subr.bf16.mxu0 0
  %239 = vmatpush1.bf16.msra.mxu0 0
  %240 = vmatprep.subr.bf16.mxu0 0
  %241 = vmatpush1.bf16.msra.mxu0 0
  %242 = vmatprep.subr.bf16.mxu0 0
  %243 = vmatpush1.bf16.msra.mxu0 0
  %244 = vmatprep.subr.bf16.mxu0 0
  %245 = vmatpush1.bf16.msra.mxu0 0
  %246 = vmatprep.subr.bf16.mxu0 0
  %247 = vmatpush1.bf16.msra.mxu0 0
  %248 = vmatprep.subr.bf16.mxu0 0
  %249 = vmatpush1.bf16.msra.mxu0 0
  %250 = vmatprep.subr.bf16.mxu0 0
  %251 = vmatpush1.bf16.msra.mxu0 0
  %252 = vmatprep.subr.bf16.mxu0 0
  %253 = vmatpush1.bf16.msra.mxu0 0
  %254 = vmatprep.subr.bf16.mxu0 0
  %255 = vmatpush1.bf16.msra.mxu0 0
  %256 = vmatprep.subr.bf16.mxu0 0
  %257 = vmatpush1.bf16.msra.mxu0 0
  %258 = vmatprep.subr.bf16.mxu0 0
  %259 = vmatpush1.bf16.msra.mxu0 0
  %260 = vmatprep.subr.bf16.mxu0 0
  %261 = vmatpush1.bf16.msra.mxu0 0
  %262 = vmatprep.subr.bf16.mxu0 0
  %263 = vmatpush1.bf16.msra.mxu0 0
  %264 = vmatprep.subr.bf16.mxu0 0
  %265 = vmatpush1.bf16.msra.mxu0 0
  %266 = vmatprep.mubr.bf16.mxu0 0
  %267 = vmatmul.mubr.bf16.gmra.mrb[0].mxu0 %v229
  %v268 = vpop.f32.mrb[0].mxu0
  %v269 = vadd.f32 %v225, %v268
  %v270 = vpop.f32.mrb[0].mxu0
  %v271 = vpop.f32.mrb[0].mxu0
  %v272 = vadd.f32 %v225, %v271
  %v273 = vpop.f32.mrb[0].mxu0
  %274 = vmatprep.mubr.bf16.mxu0 0
  %275 = vmatmul.mubr.bf16.gmra.mrb[0].mxu0 %v232
  %v276 = vpop.f32.mrb[0].mxu0
  %v277 = vadd.f32 %v225, %v276
  %v278 = vpop.f32.mrb[0].mxu0
  %v279 = vpop.f32.mrb[0].mxu0
  %v280 = vadd.f32 %v225, %v279
  %v281 = vpop.f32.mrb[0].mxu0
  %282 = vdwg.mxu0
  %v283 = vxor.u32 %v269, 2147483648
  %v284 = vxor.u32 %v272, 2147483648
  %v285 = vxor.u32 %v277, 2147483648
  %v286 = vxor.u32 %v280, 2147483648
  %v287 = vmul.f32 %v283, 1.442695
  %v288 = vpow.pop %v287
  %v289 = vmul.f32 %v284, 1.442695
  %v290 = vpow.pop %v289
  %v291 = vmul.f32 %v285, 1.442695
  %v292 = vpow.pop %v291
  %v293 = vmul.f32 %v286, 1.442695
  %v294 = vpow.pop %v293
  %v295 = vadd.f32 %v288, 1.0
  %v296 = vadd.f32 %v290, 1.0
  %v297 = vadd.f32 %v292, 1.0
  %v298 = vadd.f32 %v294, 1.0
  %v299 = vrcp.pop %v295
  %v300 = vmul.f32 1.0, %v299
  %v301 = vrcp.pop %v296
  %v302 = vmul.f32 1.0, %v301
  %v303 = vrcp.pop %v297
  %v304 = vmul.f32 1.0, %v303
  %v305 = vrcp.pop %v298
  %v306 = vmul.f32 1.0, %v305
  %v307 = vmul.f32 %v300, 0.5
  %v308 = vmul.f32 %v302, 0.5
  %v309 = vmul.f32 %v304, 0.5
  %v310 = vmul.f32 %v306, 0.5
  %315 = vrot.lane.b32.xlu0 %v307, 126
  %v316 = vpop.permute.xlu0 %315
  %317 = vrot.lane.b32.xlu0 %v308, 126
  %v318 = vpop.permute.xlu0 %317
  %319 = vrot.lane.b32.xlu0 %v309, 126
  %v320 = vpop.permute.xlu0 %319
  %321 = vrot.lane.b32.xlu0 %v310, 126
  %v322 = vpop.permute.xlu0 %321
  %v327 = vsub.f32 %v300, %v316
  %v328 = vsub.f32 %v302, %v318
  %v329 = vsub.f32 %v304, %v320
  %v330 = vsub.f32 %v306, %v322
  %v331 = vadd.f32 %v300, %v316
  %v332 = vadd.f32 %v302, %v318
  %v333 = vadd.f32 %v304, %v320
  %v334 = vadd.f32 %v306, %v322
  %339 = vrot.lane.b32.xlu0 %v327, 120
  %v340 = vpop.permute.xlu0 %339
  %341 = vrot.lane.b32.xlu0 %v328, 120
  %v342 = vpop.permute.xlu0 %341
  %343 = vrot.lane.b32.xlu0 %v329, 120
  %v344 = vpop.permute.xlu0 %343
  %345 = vrot.lane.b32.xlu0 %v330, 120
  %v346 = vpop.permute.xlu0 %345
  %355 = vrot.lane.b32.xlu0 %v331, 122
  %v356 = vpop.permute.xlu0 %355
  %357 = vrot.lane.b32.xlu0 %v332, 122
  %v358 = vpop.permute.xlu0 %357
  %359 = vrot.lane.b32.xlu0 %v333, 122
  %v360 = vpop.permute.xlu0 %359
  %361 = vrot.lane.b32.xlu0 %v334, 122
  %v362 = vpop.permute.xlu0 %361
  %vm367 = vcmask 15360
  %v368 = vsel %vm367, %v340, %v356
  %v369 = vsel %vm367, %v342, %v358
  %v370 = vsel %vm367, %v344, %v360
  %v371 = vsel %vm367, %v346, %v362
  %v372 = vld [vmem:[%s4] sm:$0xff]
  %v373 = vld [vmem:[%s4 + $0x8] sm:$0xff]
  %v374 = vld [vmem:[%s4 + $0x10] sm:$0xff]
  %v375 = vld [vmem:[%s4 + $0x18] sm:$0xff]
  %v376 = vmul.f32 %v368, %v372
  %v377 = vmul.f32 %v369, %v373
  %v378 = vmul.f32 %v370, %v374
  %v379 = vmul.f32 %v371, %v375
  %384 = vrot.lane.b32.xlu0 %v376, 8
  %v385 = vpop.permute.xlu0 %384
  %386 = vrot.lane.b32.xlu0 %v377, 8
  %v387 = vpop.permute.xlu0 %386
  %388 = vrot.lane.b32.xlu0 %v378, 8
  %v389 = vpop.permute.xlu0 %388
  %390 = vrot.lane.b32.xlu0 %v379, 8
  %v391 = vpop.permute.xlu0 %390
  %vm396 = vcmask 64512
  %v397 = vsel %vm396, %v300, %v385
  %v398 = vsel %vm396, %v302, %v387
  %v399 = vsel %vm396, %v304, %v389
  %v400 = vsel %vm396, %v306, %v391
  %vm401 = vcmask 97280
  %402 = vst.msk [vmem:[%s5] sm:$0xff] %vm401, %v397
  %403 = vst.msk [vmem:[%s5 + $0x8] sm:$0xff] %vm401, %v398
  %404 = vst.msk [vmem:[%s5 + $0x10] sm:$0xff] %vm401, %v399
  %405 = vst.msk [vmem:[%s5 + $0x18] sm:$0xff] %vm401, %v400
  // Predicated region
  $region22: #{model_wrapper_forward.1} parent=0 // pred_check
    _
  $region23: #{model_wrapper_forward.1} parent=0 // pred_check_branch
    %407 = sbr.rel (0) target = $region25
  $region24: #{model_wrapper_forward.1} parent=0 // pred_region
    _
  $region25: #{model_wrapper_forward.1} parent=0 // pred_fallthru
    _
  // Predicated region
  $region26: #{model_wrapper_forward.1} parent=0 // pred_check
    _
  $region27: #{model_wrapper_forward.1} parent=0 // pred_check_branch
    %409 = sbr.rel (0) target = $region29
  $region28: #{model_wrapper_forward.1} parent=0 // pred_region
    _
  $region29: #{model_wrapper_forward.1} parent=0 // pred_fallthru
    _

</llo_original>
